<compile_context>
chip_gen: v7x
topology: tpu7x:2x2x1
jax: 0.10.0
libtpu: 0.0.40
codegen_flags: <defaults>
</compile_context>

<pallas_src>
import functools

import jax
import jax.numpy as jnp
import numpy as np
from jax.experimental import pallas as pl
from jax.experimental.pallas import tpu as pltpu


_Y_LANE = 128                          # lane width of the small, resident pred slabs
_TARGET_BLOCK_BYTES = 2 * 1024 * 1024  # ~2 MiB f32 per image block per buffer
_LANE_CANDIDATES = (1024, 512, 256, 128)


def _round_up(x, m):
    return -(-x // m) * m


def _pad_pred_slab(x):
    """Flatten tiny prediction tensors into a zero-padded (rows, 128) slab."""
    flat = x.reshape(-1)
    n = flat.shape[0]
    rows = max(1, _round_up(n, _Y_LANE) // _Y_LANE)
    pad = rows * _Y_LANE - n
    if pad:
        flat = jnp.pad(flat, (0, pad))
    return flat.reshape(rows, _Y_LANE)


def _image_slab_plan(n):
    """Pick (lane, tile_rows, padded_rows) for an image with n elements.

    Prefers a lane width that divides n (so the host-side reshape is a free view,
    no jnp.pad copy) and splits the rows into near-equal multiple-of-8 chunks of
    at most ~_TARGET_BLOCK_BYTES each (pad waste bounded by < 8 rows per chunk).
    """
    lane = _LANE_CANDIDATES[-1]
    for cand in _LANE_CANDIDATES:
        if n % cand == 0:
            lane = cand
            break
    rows = -(-n // lane)
    max_rows = max(8, (_TARGET_BLOCK_BYTES // (lane * 4)) // 8 * 8)
    if rows <= max_rows:
        # single full block: no 8-row constraint, no padding, no grid overhead
        return lane, rows, rows
    n_chunks = -(-rows // max_rows)
    tile_rows = _round_up(-(-rows // n_chunks), 8)
    return lane, tile_rows, n_chunks * tile_rows


def _image_slab(x, lane, padded_rows):
    """Flatten `x` into a (padded_rows, lane) slab; pads (copies) only if needed."""
    flat = x.reshape(-1)
    pad = padded_rows * lane - flat.shape[0]
    if pad:
        flat = jnp.pad(flat, (0, pad))   # zeros contribute 0 to every sum
    return flat.reshape(padded_rows, lane)


def _fused_loss_kernel(y_ref, ly_ref, a_ref, b_ref, out_ref,
                       acc_min, acc_sum, acc_l1, acc_sq, *, inv_n_y, eps):
    """Grid axis 0 walks tiles of the image slabs; pred slabs are grid-resident.

    Steady state: stream one tile of each image, reduce it to an (8, lane) (or
    (1, lane)) partial with pure VPU adds, accumulate into small VMEM scratch.
    Final step: tiny cross-lane reduces + fused scalar math.
    """
    i = pl.program_id(0)
    tile_rows, lane = a_ref.shape

    @pl.when(i == 0)
    def _init():
        acc_min[...] = jnp.zeros_like(acc_min)
        acc_sum[...] = jnp.zeros_like(acc_sum)
        # Small dense-prediction reductions done up front so they hide under the
        # image DMA pipeline instead of sitting in the serial tail.
        d = y_ref[...].astype(jnp.float32) - ly_ref[...].astype(jnp.float32)
        acc_l1[...] = jnp.sum(jnp.abs(d), axis=0, keepdims=True)
        acc_sq[...] = jnp.sum(d * d, axis=0, keepdims=True)

    a = a_ref[...].astype(jnp.float32)
    b = b_ref[...].astype(jnp.float32)
    m = jnp.minimum(a, b)
    s = a + b
    if tile_rows % 8 == 0:
        # free view (split on the 8-sublane boundary) + VPU adds over axis 0
        m = m.reshape(tile_rows // 8, 8, lane).sum(axis=0)
        s = s.reshape(tile_rows // 8, 8, lane).sum(axis=0)
    else:
        # only hit for tiny single-block inputs
        m = jnp.sum(m, axis=0, keepdims=True)
        s = jnp.sum(s, axis=0, keepdims=True)
    acc_min[...] += m
    acc_sum[...] += s

    @pl.when(i == pl.num_programs(0) - 1)
    def _finalize():
        inter = jnp.sum(acc_min[...])
        union = jnp.sum(acc_sum[...]) - inter
        iou_loss = 1.0 - inter / (union + eps)                 # IoULoss.forward
        l1 = jnp.sum(acc_l1[...]) * inv_n_y
        mse = jnp.sum(acc_sq[...]) * inv_n_y                   # df == mse in torch module
        total = iou_loss * (1.0 + mse) + l1                    # iou*(1+df.item()) + l1
        out_ref[...] = jnp.full(out_ref.shape, total, dtype=out_ref.dtype)


@functools.partial(jax.jit, static_argnames=("eps",))
def my_loss(yhat, yhat_image, label_y, label_image, eps=1e-6):
    n_y = yhat.size  # original (unpadded) element count for the L1/MSE means

    # small dense predictions -> lane-dense slabs, resident across the grid
    y2 = _pad_pred_slab(yhat)
    ly2 = _pad_pred_slab(label_y)

    # images -> lane-dense slabs tiled along the grid (reduction) axis
    lane, tile_rows, padded_rows = _image_slab_plan(yhat_image.size)
    a2 = _image_slab(yhat_image, lane, padded_rows)
    b2 = _image_slab(label_image, lane, padded_rows)
    grid = (padded_rows // tile_rows,)
    acc_rows = 8 if tile_rows % 8 == 0 else 1

    kernel = functools.partial(
        _fused_loss_kernel, inv_n_y=1.0 / float(n_y), eps=float(eps))

    out = pl.pallas_call(
        kernel,
        out_shape=jax.ShapeDtypeStruct((1, _Y_LANE), jnp.float32),
        grid_spec=pltpu.PrefetchScalarGridSpec(
            num_scalar_prefetch=0,
            grid=grid,
            in_specs=[
                pl.BlockSpec(y2.shape, lambda i: (0, 0)),           # resident
                pl.BlockSpec(ly2.shape, lambda i: (0, 0)),          # resident
                pl.BlockSpec((tile_rows, lane), lambda i: (i, 0)),
                pl.BlockSpec((tile_rows, lane), lambda i: (i, 0)),
            ],
            out_specs=pl.BlockSpec((1, _Y_LANE), lambda i: (0, 0)),
            scratch_shapes=[
                pltpu.VMEM((acc_rows, lane), jnp.float32),   # acc_min
                pltpu.VMEM((acc_rows, lane), jnp.float32),   # acc_sum (a + b)
                pltpu.VMEM((1, _Y_LANE), jnp.float32),       # acc_l1 partial
                pltpu.VMEM((1, _Y_LANE), jnp.float32),       # acc_sq partial
            ],
        ),
        compiler_params=pltpu.CompilerParams(
            dimension_semantics=("arbitrary",),   # reduction axis on one TC
            vmem_limit_bytes=32 * 1024 * 1024,    # safe for v7x's scoped limit
        ),
    )(y2, ly2, a2, b2)
    return out[0, 0]


def _reference(yhat, yhat_image, label_y, label_image, eps=1e-6):
    """Host-side float64 reference (matches the torch module's forward)."""
    d = np.asarray(yhat, dtype=np.float64) - np.asarray(label_y, dtype=np.float64)
    l1 = np.mean(np.abs(d))
    mse = np.mean(d * d)
    a = np.asarray(yhat_image, dtype=np.float64)
    b = np.asarray(label_image, dtype=np.float64)
    inter = np.sum(np.minimum(a, b))
    union = np.sum(a) + np.sum(b) - inter
    iou = inter / (union + eps)
    return (1.0 - iou) * (1.0 + mse) + l1


if __name__ == "__main__":
    key = jax.random.PRNGKey(0)
    k1, k2, k3, k4 = jax.random.split(key, 4)

    # small shapes consistent with the module: dense preds + NCHW mask images
    B, D = 2, 32
    C, H, W = 4, 16, 16

    yhat = jax.random.normal(k1, (B, D), dtype=jnp.float32)
    label_y = jax.random.normal(k2, (B, D), dtype=jnp.float32)
    yhat_image = jax.nn.sigmoid(jax.random.normal(k3, (B, C, H, W), dtype=jnp.float32))
    label_image = jax.nn.sigmoid(jax.random.normal(k4, (B, C, H, W), dtype=jnp.float32))

    total = jax.block_until_ready(my_loss(yhat, yhat_image, label_y, label_image))
    ref = _reference(yhat, yhat_image, label_y, label_image)
    assert np.allclose(np.asarray(total), ref, rtol=1e-4, atol=1e-5), (total, ref)

    # medium images: single large lane-dense block, no host-side padding copy
    k5, k6 = jax.random.split(k4)
    yi_med = jax.nn.sigmoid(jax.random.normal(k5, (2, 4, 160, 160), dtype=jnp.float32))
    li_med = jax.nn.sigmoid(jax.random.normal(k6, (2, 4, 160, 160), dtype=jnp.float32))
    total_med = jax.block_until_ready(my_loss(yhat, yi_med, label_y, li_med))
    ref_med = _reference(yhat, yi_med, label_y, li_med)
    assert np.allclose(np.asarray(total_med), ref_med, rtol=1e-4, atol=1e-5), (total_med, ref_med)

    # larger images: exercises the multi-step accumulator grid (grid > 1)
    k7, k8 = jax.random.split(k6)
    yi_big = jax.nn.sigmoid(jax.random.normal(k7, (2, 4, 320, 320), dtype=jnp.float32))
    li_big = jax.nn.sigmoid(jax.random.normal(k8, (2, 4, 320, 320), dtype=jnp.float32))
    total_big = jax.block_until_ready(my_loss(yhat, yi_big, label_y, li_big))
    ref_big = _reference(yhat, yi_big, label_y, li_big)
    assert np.allclose(np.asarray(total_big), ref_big, rtol=1e-4, atol=1e-5), (total_big, ref_big)

    print("KERNEL_OK")
</pallas_src>

<mosaic_0001>
module attributes {stable_mosaic.version = 11 : i64} {
  func.func @_fused_loss_kernel(%arg0: i32, %arg1: memref<1x128xf32, #tpu.memory_space<vmem>>, %arg2: memref<1x128xf32, #tpu.memory_space<vmem>>, %arg3: memref<2x1024xf32, #tpu.memory_space<vmem>>, %arg4: memref<2x1024xf32, #tpu.memory_space<vmem>>, %arg5: memref<1x128xf32, #tpu.memory_space<vmem>>, %arg6: memref<1x1024xf32, #tpu.memory_space<vmem>>, %arg7: memref<1x1024xf32, #tpu.memory_space<vmem>>, %arg8: memref<1x128xf32, #tpu.memory_space<vmem>>, %arg9: memref<1x128xf32, #tpu.memory_space<vmem>>) attributes {dimension_semantics = [#tpu.dimension_semantics<arbitrary>], iteration_bounds = array<i64: 1>, scalar_prefetch = 0 : i64, scratch_operands = 4 : i64, tpu.core_type = #tpu.core_type<tc>, window_params = [{pipeline_mode = #tpu.pipeline_mode<synchronous>, transform_indices = @transform_0, window_bounds = array<i64: 1, 128>}, {pipeline_mode = #tpu.pipeline_mode<synchronous>, transform_indices = @transform_1, window_bounds = array<i64: 1, 128>}, {transform_indices = @transform_2, window_bounds = array<i64: 2, 1024>}, {transform_indices = @transform_3, window_bounds = array<i64: 2, 1024>}, {pipeline_mode = #tpu.pipeline_mode<synchronous>, transform_indices = @transform_4, window_bounds = array<i64: 1, 128>}]} {
    %c0_i32 = arith.constant 0 : i32
    %0 = arith.cmpi eq, %arg0, %c0_i32 : i32
    %1 = arith.extui %0 : i1 to i32
    %c0_i32_0 = arith.constant 0 : i32
    %2 = arith.cmpi ne, %1, %c0_i32_0 : i32
    scf.if %2 {
      %cst_15 = arith.constant 0.000000e+00 : f32
      %20 = vector.broadcast %cst_15 : f32 to vector<1x1024xf32>
      %c0_16 = arith.constant 0 : index
      %c0_17 = arith.constant 0 : index
      %21 = vector.load %arg6[%c0_16, %c0_17] : memref<1x1024xf32, #tpu.memory_space<vmem>>, vector<1x1024xf32>
      tpu.vector_store %arg6[%c0_16, %c0_17], %20 {strides = array<i32>} : memref<1x1024xf32, #tpu.memory_space<vmem>>, vector<1x1024xf32>,
      %cst_18 = arith.constant 0.000000e+00 : f32
      %22 = vector.broadcast %cst_18 : f32 to vector<1x1024xf32>
      %c0_19 = arith.constant 0 : index
      %c0_20 = arith.constant 0 : index
      %23 = vector.load %arg7[%c0_19, %c0_20] : memref<1x1024xf32, #tpu.memory_space<vmem>>, vector<1x1024xf32>
      tpu.vector_store %arg7[%c0_19, %c0_20], %22 {strides = array<i32>} : memref<1x1024xf32, #tpu.memory_space<vmem>>, vector<1x1024xf32>,
      %c0_21 = arith.constant 0 : index
      %c0_22 = arith.constant 0 : index
      %24 = vector.load %arg1[%c0_21, %c0_22] : memref<1x128xf32, #tpu.memory_space<vmem>>, vector<1x128xf32>
      %c0_23 = arith.constant 0 : index
      %c0_24 = arith.constant 0 : index
      %25 = vector.load %arg2[%c0_23, %c0_24] : memref<1x128xf32, #tpu.memory_space<vmem>>, vector<1x128xf32>
      %26 = arith.subf %24, %25 : vector<1x128xf32>
      %27 = math.absf %26 : vector<1x128xf32>
      %cst_25 = arith.constant dense<0.000000e+00> : vector<128xf32>
      %28 = vector.multi_reduction <add>, %27, %cst_25 [0] : vector<1x128xf32> to vector<128xf32>
      %29 = vector.shape_cast %28 : vector<128xf32> to vector<1x128xf32>
      %c0_26 = arith.constant 0 : index
      %c0_27 = arith.constant 0 : index
      %30 = vector.load %arg8[%c0_26, %c0_27] : memref<1x128xf32, #tpu.memory_space<vmem>>, vector<1x128xf32>
      tpu.vector_store %arg8[%c0_26, %c0_27], %29 {strides = array<i32>} : memref<1x128xf32, #tpu.memory_space<vmem>>, vector<1x128xf32>,
      %31 = arith.mulf %26, %26 : vector<1x128xf32>
      %cst_28 = arith.constant dense<0.000000e+00> : vector<128xf32>
      %32 = vector.multi_reduction <add>, %31, %cst_28 [0] : vector<1x128xf32> to vector<128xf32>
      %33 = vector.shape_cast %32 : vector<128xf32> to vector<1x128xf32>
      %c0_29 = arith.constant 0 : index
      %c0_30 = arith.constant 0 : index
      %34 = vector.load %arg9[%c0_29, %c0_30] : memref<1x128xf32, #tpu.memory_space<vmem>>, vector<1x128xf32>
      tpu.vector_store %arg9[%c0_29, %c0_30], %33 {strides = array<i32>} : memref<1x128xf32, #tpu.memory_space<vmem>>, vector<1x128xf32>,
    } else {
    }
    %c0 = arith.constant 0 : index
    %c0_1 = arith.constant 0 : index
    %3 = vector.load %arg3[%c0, %c0_1] : memref<2x1024xf32, #tpu.memory_space<vmem>>, vector<2x1024xf32>
    %c0_2 = arith.constant 0 : index
    %c0_3 = arith.constant 0 : index
    %4 = vector.load %arg4[%c0_2, %c0_3] : memref<2x1024xf32, #tpu.memory_space<vmem>>, vector<2x1024xf32>
    %5 = arith.minimumf %3, %4 : vector<2x1024xf32>
    %6 = arith.addf %3, %4 : vector<2x1024xf32>
    %cst = arith.constant dense<0.000000e+00> : vector<1024xf32>
    %7 = vector.multi_reduction <add>, %5, %cst [0] : vector<2x1024xf32> to vector<1024xf32>
    %8 = vector.shape_cast %7 : vector<1024xf32> to vector<1x1024xf32>
    %cst_4 = arith.constant dense<0.000000e+00> : vector<1024xf32>
    %9 = vector.multi_reduction <add>, %6, %cst_4 [0] : vector<2x1024xf32> to vector<1024xf32>
    %10 = vector.shape_cast %9 : vector<1024xf32> to vector<1x1024xf32>
    %c0_5 = arith.constant 0 : index
    %c0_6 = arith.constant 0 : index
    %11 = vector.load %arg6[%c0_5, %c0_6] : memref<1x1024xf32, #tpu.memory_space<vmem>>, vector<1x1024xf32>
    %12 = arith.addf %11, %8 : vector<1x1024xf32>
    %c0_7 = arith.constant 0 : index
    %c0_8 = arith.constant 0 : index
    %13 = vector.load %arg6[%c0_7, %c0_8] : memref<1x1024xf32, #tpu.memory_space<vmem>>, vector<1x1024xf32>
    tpu.vector_store %arg6[%c0_7, %c0_8], %12 {strides = array<i32>} : memref<1x1024xf32, #tpu.memory_space<vmem>>, vector<1x1024xf32>,
    %c0_9 = arith.constant 0 : index
    %c0_10 = arith.constant 0 : index
    %14 = vector.load %arg7[%c0_9, %c0_10] : memref<1x1024xf32, #tpu.memory_space<vmem>>, vector<1x1024xf32>
    %15 = arith.addf %14, %10 : vector<1x1024xf32>
    %c0_11 = arith.constant 0 : index
    %c0_12 = arith.constant 0 : index
    %16 = vector.load %arg7[%c0_11, %c0_12] : memref<1x1024xf32, #tpu.memory_space<vmem>>, vector<1x1024xf32>
    tpu.vector_store %arg7[%c0_11, %c0_12], %15 {strides = array<i32>} : memref<1x1024xf32, #tpu.memory_space<vmem>>, vector<1x1024xf32>,
    %c0_i32_13 = arith.constant 0 : i32
    %17 = arith.cmpi eq, %arg0, %c0_i32_13 : i32
    %18 = arith.extui %17 : i1 to i32
    %c0_i32_14 = arith.constant 0 : i32
    %19 = arith.cmpi ne, %18, %c0_i32_14 : i32
    scf.if %19 {
      %c0_15 = arith.constant 0 : index
      %c0_16 = arith.constant 0 : index
      %20 = vector.load %arg6[%c0_15, %c0_16] : memref<1x1024xf32, #tpu.memory_space<vmem>>, vector<1x1024xf32>
      %21 = vector.shape_cast %20 : vector<1x1024xf32> to vector<1x1x1024xf32>
      %cst_17 = arith.constant dense<0.000000e+00> : vector<1xf32>
      %22 = vector.multi_reduction <add>, %21, %cst_17 [1, 2] : vector<1x1x1024xf32> to vector<1xf32>
      %23 = vector.shape_cast %22 : vector<1xf32> to vector<1x1x1xf32>
      %24 = vector.extract %23[0, 0, 0] : f32 from vector<1x1x1xf32>
      %c0_18 = arith.constant 0 : index
      %c0_19 = arith.constant 0 : index
      %25 = vector.load %arg7[%c0_18, %c0_19] : memref<1x1024xf32, #tpu.memory_space<vmem>>, vector<1x1024xf32>
      %26 = vector.shape_cast %25 : vector<1x1024xf32> to vector<1x1x1024xf32>
      %cst_20 = arith.constant dense<0.000000e+00> : vector<1xf32>
      %27 = vector.multi_reduction <add>, %26, %cst_20 [1, 2] : vector<1x1x1024xf32> to vector<1xf32>
      %28 = vector.shape_cast %27 : vector<1xf32> to vector<1x1x1xf32>
      %29 = vector.extract %28[0, 0, 0] : f32 from vector<1x1x1xf32>
      %30 = arith.subf %29, %24 : f32
      %cst_21 = arith.constant 9.99999997E-7 : f32
      %31 = arith.addf %30, %cst_21 : f32
      %32 = arith.divf %24, %31 : f32
      %cst_22 = arith.constant 1.000000e+00 : f32
      %33 = arith.subf %cst_22, %32 : f32
      %c0_23 = arith.constant 0 : index
      %c0_24 = arith.constant 0 : index
      %34 = vector.load %arg8[%c0_23, %c0_24] : memref<1x128xf32, #tpu.memory_space<vmem>>, vector<1x128xf32>
      %35 = vector.shape_cast %34 : vector<1x128xf32> to vector<1x1x128xf32>
      %cst_25 = arith.constant dense<0.000000e+00> : vector<1xf32>
      %36 = vector.multi_reduction <add>, %35, %cst_25 [1, 2] : vector<1x1x128xf32> to vector<1xf32>
      %37 = vector.shape_cast %36 : vector<1xf32> to vector<1x1x1xf32>
      %38 = vector.extract %37[0, 0, 0] : f32 from vector<1x1x1xf32>
      %cst_26 = arith.constant 1.562500e-02 : f32
      %39 = arith.mulf %38, %cst_26 : f32
      %c0_27 = arith.constant 0 : index
      %c0_28 = arith.constant 0 : index
      %40 = vector.load %arg9[%c0_27, %c0_28] : memref<1x128xf32, #tpu.memory_space<vmem>>, vector<1x128xf32>
      %41 = vector.shape_cast %40 : vector<1x128xf32> to vector<1x1x128xf32>
      %cst_29 = arith.constant dense<0.000000e+00> : vector<1xf32>
      %42 = vector.multi_reduction <add>, %41, %cst_29 [1, 2] : vector<1x1x128xf32> to vector<1xf32>
      %43 = vector.shape_cast %42 : vector<1xf32> to vector<1x1x1xf32>
      %44 = vector.extract %43[0, 0, 0] : f32 from vector<1x1x1xf32>
      %cst_30 = arith.constant 1.562500e-02 : f32
      %45 = arith.mulf %44, %cst_30 : f32
      %cst_31 = arith.constant 1.000000e+00 : f32
      %46 = arith.addf %cst_31, %45 : f32
      %47 = arith.mulf %33, %46 : f32
      %48 = arith.addf %47, %39 : f32
      %49 = vector.broadcast %48 : f32 to vector<1x128xf32>
      %c0_32 = arith.constant 0 : index
      %c0_33 = arith.constant 0 : index
      %50 = vector.load %arg5[%c0_32, %c0_33] : memref<1x128xf32, #tpu.memory_space<vmem>>, vector<1x128xf32>
      tpu.vector_store %arg5[%c0_32, %c0_33], %49 {strides = array<i32>} : memref<1x128xf32, #tpu.memory_space<vmem>>, vector<1x128xf32>,
    } else {
    }
    return
  }
  func.func @transform_0(%arg0: i32) -> (i32, i32) {
    %c0_i32 = arith.constant 0 : i32
    %c0_i32_0 = arith.constant 0 : i32
    %c0_i32_1 = arith.constant 0 : i32
    return %c0_i32, %c0_i32_0 : i32, i32
  }
  func.func @transform_1(%arg0: i32) -> (i32, i32) {
    %c0_i32 = arith.constant 0 : i32
    %c0_i32_0 = arith.constant 0 : i32
    %c0_i32_1 = arith.constant 0 : i32
    return %c0_i32, %c0_i32_0 : i32, i32
  }
  func.func @transform_2(%arg0: i32) -> (i32, i32) {
    %c0_i32 = arith.constant 0 : i32
    %c0_i32_0 = arith.constant 0 : i32
    return %arg0, %c0_i32 : i32, i32
  }
  func.func @transform_3(%arg0: i32) -> (i32, i32) {
    %c0_i32 = arith.constant 0 : i32
    %c0_i32_0 = arith.constant 0 : i32
    return %arg0, %c0_i32 : i32, i32
  }
  func.func @transform_4(%arg0: i32) -> (i32, i32) {
    %c0_i32 = arith.constant 0 : i32
    %c0_i32_0 = arith.constant 0 : i32
    %c0_i32_1 = arith.constant 0 : i32
    return %c0_i32, %c0_i32_0 : i32, i32
  }
}

</mosaic_0001>

<llo_original>
// kernel: my_loss.1
$region0: #{my_loss.1}
  #allocation0 [shape = 'u32[]', space=smem, size = 0x4, offset = 0x4, fixed_abs, tag = 'smem constant byte address 0x4 - core index']
  #allocation1 [shape = 'u32[144,128]{1,0:T(1,128)}', space=vmem, size = 0x12000, scoped, tag = 'internal scratch']
  #allocation2 [shape = 'f32[1,1024]{1,0:T(1,128)}', space=vmem, size = 0x1000, scoped, tag = 'scratch operand']
  #allocation3 [shape = 'f32[1,1024]{1,0:T(1,128)}', space=vmem, size = 0x1000, scoped, tag = 'scratch operand']
  #allocation4 [shape = 'f32[1,128]{1,0:T(1,128)}', space=vmem, size = 0x200, scoped, tag = 'scratch operand']
  #allocation5 [shape = 'f32[1,128]{1,0:T(1,128)}', space=vmem, size = 0x200, scoped, tag = 'scratch operand']
  %s0 = inlined_call_operand.vmem [shape: f32[1,128], index: 0, kind: input, shape index: {}]
  %s1 = inlined_call_operand.vmem [shape: f32[1,128], index: 1, kind: input, shape index: {}]
  %s2 = inlined_call_operand.vmem [shape: f32[2,1024], index: 2, kind: input, shape index: {}]
  %s3 = inlined_call_operand.vmem [shape: f32[2,1024], index: 3, kind: input, shape index: {}]
  %s4 = inlined_call_operand.hbm [shape: f32[1,128], index: 4, kind: output, shape index: {}]
  %s5 = sld [smem:[#allocation0]]
  $region34: #{my_loss.1} parent=0
    _
  %s7 = ssub.s32 1, %s5
  %s8 = scalar_select 0, %s7, %s5
  $region1: #{my_loss.1} parent=0
    #allocation6 [shape = 'u8[512]{0}', space=vmem, size = 0x400, scoped, tag = 'output window, operand 0, single buffered']
    #allocation7 [shape = 's32[1]{0}', space=sflag, size = 0x4, scoped, tag = 'scoped memory for my_loss.1']
    %9 = vsyncpa [#allocation7], 0
    // Predicated region
    $region2: #{my_loss.1} parent=1 // pred_check
      _
    $region3: #{my_loss.1} parent=1 // pred_check_branch
      %11 = sbr.rel (0) target = $region5
    $region4: #{my_loss.1} parent=1 // pred_region
      _
    $region5: #{my_loss.1} parent=1 // pred_fallthru
      _
    // Predicated region
    $region6: #{my_loss.1} parent=1 // pred_check
      _
    $region7: #{my_loss.1} parent=1 // pred_check_branch
      %13 = sbr.rel (0) target = $region9
    $region8: #{my_loss.1} parent=1 // pred_region
      _
    $region9: #{my_loss.1} parent=1 // pred_fallthru
      _
    // Predicated region
    $region10: #{my_loss.1} parent=1 // pred_check
      _
    $region11: #{my_loss.1} parent=1 // pred_check_branch
      %15 = sbr.rel (0) target = $region13
    $region12: #{my_loss.1} parent=1 // pred_region
      _
    $region13: #{my_loss.1} parent=1 // pred_fallthru
      _
    // Predicated region
    $region14: #{my_loss.1} parent=1 // pred_check
      _
    $region15: #{my_loss.1} parent=1 // pred_check_branch
      %17 = sbr.rel (0) target = $region17
    $region16: #{my_loss.1} parent=1 // pred_region
      _
    $region17: #{my_loss.1} parent=1 // pred_fallthru
      _
    %p18 = scmp.eq.s32.totalorder 0, 0
    // Predicated region
    $region18: #{my_loss.1} parent=1 // pred_check
      %p19 = pneg %p18
    $region19: #{my_loss.1} parent=1 // pred_check_branch
      %21 = sbr.rel (%p19) target = $region21
    $region20: #{my_loss.1} parent=1 // pred_region
      %22 = vst [vmem:[#allocation2] sm:$0xff] 0.0
      %23 = vst [vmem:[#allocation3] sm:$0xff] 0.0
      %v24 = vld [vmem:[%s0] sm:$0x1]
      %v25 = vld [vmem:[%s1] sm:$0x1]
      %v26 = vsub.f32 %v24, %v25
      %v27 = vand.u32 2147483647, %v26
      %v28 = vadd.f32 %v27, 0.0
      %29 = vst [vmem:[#allocation4] sm:$0x1] %v28
      %v30 = vmul.f32 %v26, %v26
      %v31 = vadd.f32 %v30, 0.0
      %32 = vst [vmem:[#allocation5] sm:$0x1] %v31
    $region21: #{my_loss.1} parent=1 // pred_fallthru
      _
    %v33 = vld [vmem:[%s2] sm:$0xff]
    %v34 = vld [vmem:[%s2 + $0x8] sm:$0xff]
    %v35 = vld [vmem:[%s3] sm:$0xff]
    %v36 = vld [vmem:[%s3 + $0x8] sm:$0xff]
    %v37 = vmin.f32 %v33, %v35
    %v38 = vmin.f32 %v34, %v36
    %v39 = vadd.f32 %v33, %v35
    %v40 = vadd.f32 %v34, %v36
    %v43 = vcombine.high %v37, %v37
    %v45 = vunpack.c.l.s4 1983009808
    %v46 = vunpack.c.0.s8 %v45
    %v47 = vlaneseq
    %v48 = vshrl.u32 %v47, 7
    %v49 = vsub.s32 %v46, %v48
    %v50 = vrot.slane %v37, %v49
    %v52 = vunpack.c.l.s4 1983009808
    %v53 = vunpack.c.0.s8 %v52
    %v54 = vlaneseq
    %v55 = vshrl.u32 %v54, 7
    %v56 = vsub.s32 %v53, %v55
    %v57 = vrot.slane %v43, %v56
    %v58 = vcombine.high %v50, %v50
    %v59 = vcombine.high %v57, %v57
    %v60 = vcombine.high %v38, %v38
    %v62 = vunpack.c.l.s4 1983009808
    %v63 = vunpack.c.0.s8 %v62
    %v64 = vlaneseq
    %v65 = vshrl.u32 %v64, 7
    %v66 = vsub.s32 %v63, %v65
    %v67 = vrot.slane %v38, %v66
    %v69 = vunpack.c.l.s4 1983009808
    %v70 = vunpack.c.0.s8 %v69
    %v71 = vlaneseq
    %v72 = vshrl.u32 %v71, 7
    %v73 = vsub.s32 %v70, %v72
    %v74 = vrot.slane %v60, %v73
    %v75 = vcombine.high %v67, %v67
    %v76 = vcombine.high %v74, %v74
    %vm85 = vcmask 1041408
    %v86 = vsel %vm85, %v50, 0.0
    %v87 = vrot.slane %v86, 4
    %v88 = vadd.f32 %v86, %v87
    %v89 = vrot.slane %v88, 2
    %v90 = vadd.f32 %v88, %v89
    %v91 = vrot.slane %v90, 1
    %v92 = vadd.f32 %v90, %v91
    %v93 = vsel %vm85, %v58, 0.0
    %v94 = vrot.slane %v93, 4
    %v95 = vadd.f32 %v93, %v94
    %v96 = vrot.slane %v95, 2
    %v97 = vadd.f32 %v95, %v96
    %v98 = vrot.slane %v97, 1
    %v99 = vadd.f32 %v97, %v98
    %v100 = vsel %vm85, %v57, 0.0
    %v101 = vrot.slane %v100, 4
    %v102 = vadd.f32 %v100, %v101
    %v103 = vrot.slane %v102, 2
    %v104 = vadd.f32 %v102, %v103
    %v105 = vrot.slane %v104, 1
    %v106 = vadd.f32 %v104, %v105
    %v107 = vsel %vm85, %v59, 0.0
    %v108 = vrot.slane %v107, 4
    %v109 = vadd.f32 %v107, %v108
    %v110 = vrot.slane %v109, 2
    %v111 = vadd.f32 %v109, %v110
    %v112 = vrot.slane %v111, 1
    %v113 = vadd.f32 %v111, %v112
    %v114 = vsel %vm85, %v67, 0.0
    %v115 = vrot.slane %v114, 4
    %v116 = vadd.f32 %v114, %v115
    %v117 = vrot.slane %v116, 2
    %v118 = vadd.f32 %v116, %v117
    %v119 = vrot.slane %v118, 1
    %v120 = vadd.f32 %v118, %v119
    %v121 = vsel %vm85, %v75, 0.0
    %v122 = vrot.slane %v121, 4
    %v123 = vadd.f32 %v121, %v122
    %v124 = vrot.slane %v123, 2
    %v125 = vadd.f32 %v123, %v124
    %v126 = vrot.slane %v125, 1
    %v127 = vadd.f32 %v125, %v126
    %v128 = vsel %vm85, %v74, 0.0
    %v129 = vrot.slane %v128, 4
    %v130 = vadd.f32 %v128, %v129
    %v131 = vrot.slane %v130, 2
    %v132 = vadd.f32 %v130, %v131
    %v133 = vrot.slane %v132, 1
    %v134 = vadd.f32 %v132, %v133
    %v135 = vsel %vm85, %v76, 0.0
    %v136 = vrot.slane %v135, 4
    %v137 = vadd.f32 %v135, %v136
    %v138 = vrot.slane %v137, 2
    %v139 = vadd.f32 %v137, %v138
    %v140 = vrot.slane %v139, 1
    %v141 = vadd.f32 %v139, %v140
    %v144 = vcombine.high %v39, %v39
    %v146 = vunpack.c.l.s4 1983009808
    %v147 = vunpack.c.0.s8 %v146
    %v148 = vlaneseq
    %v149 = vshrl.u32 %v148, 7
    %v150 = vsub.s32 %v147, %v149
    %v151 = vrot.slane %v39, %v150
    %v153 = vunpack.c.l.s4 1983009808
    %v154 = vunpack.c.0.s8 %v153
    %v155 = vlaneseq
    %v156 = vshrl.u32 %v155, 7
    %v157 = vsub.s32 %v154, %v156
    %v158 = vrot.slane %v144, %v157
    %v159 = vcombine.high %v151, %v151
    %v160 = vcombine.high %v158, %v158
    %v161 = vcombine.high %v40, %v40
    %v163 = vunpack.c.l.s4 1983009808
    %v164 = vunpack.c.0.s8 %v163
    %v165 = vlaneseq
    %v166 = vshrl.u32 %v165, 7
    %v167 = vsub.s32 %v164, %v166
    %v168 = vrot.slane %v40, %v167
    %v170 = vunpack.c.l.s4 1983009808
    %v171 = vunpack.c.0.s8 %v170
    %v172 = vlaneseq
    %v173 = vshrl.u32 %v172, 7
    %v174 = vsub.s32 %v171, %v173
    %v175 = vrot.slane %v161, %v174
    %v176 = vcombine.high %v168, %v168
    %v177 = vcombine.high %v175, %v175
    %v186 = vsel %vm85, %v151, 0.0
    %v187 = vrot.slane %v186, 4
    %v188 = vadd.f32 %v186, %v187
    %v189 = vrot.slane %v188, 2
    %v190 = vadd.f32 %v188, %v189
    %v191 = vrot.slane %v190, 1
    %v192 = vadd.f32 %v190, %v191
    %v193 = vsel %vm85, %v159, 0.0
    %v194 = vrot.slane %v193, 4
    %v195 = vadd.f32 %v193, %v194
    %v196 = vrot.slane %v195, 2
    %v197 = vadd.f32 %v195, %v196
    %v198 = vrot.slane %v197, 1
    %v199 = vadd.f32 %v197, %v198
    %v200 = vsel %vm85, %v158, 0.0
    %v201 = vrot.slane %v200, 4
    %v202 = vadd.f32 %v200, %v201
    %v203 = vrot.slane %v202, 2
    %v204 = vadd.f32 %v202, %v203
    %v205 = vrot.slane %v204, 1
    %v206 = vadd.f32 %v204, %v205
    %v207 = vsel %vm85, %v160, 0.0
    %v208 = vrot.slane %v207, 4
    %v209 = vadd.f32 %v207, %v208
    %v210 = vrot.slane %v209, 2
    %v211 = vadd.f32 %v209, %v210
    %v212 = vrot.slane %v211, 1
    %v213 = vadd.f32 %v211, %v212
    %v214 = vsel %vm85, %v168, 0.0
    %v215 = vrot.slane %v214, 4
    %v216 = vadd.f32 %v214, %v215
    %v217 = vrot.slane %v216, 2
    %v218 = vadd.f32 %v216, %v217
    %v219 = vrot.slane %v218, 1
    %v220 = vadd.f32 %v218, %v219
    %v221 = vsel %vm85, %v176, 0.0
    %v222 = vrot.slane %v221, 4
    %v223 = vadd.f32 %v221, %v222
    %v224 = vrot.slane %v223, 2
    %v225 = vadd.f32 %v223, %v224
    %v226 = vrot.slane %v225, 1
    %v227 = vadd.f32 %v225, %v226
    %v228 = vsel %vm85, %v175, 0.0
    %v229 = vrot.slane %v228, 4
    %v230 = vadd.f32 %v228, %v229
    %v231 = vrot.slane %v230, 2
    %v232 = vadd.f32 %v230, %v231
    %v233 = vrot.slane %v232, 1
    %v234 = vadd.f32 %v232, %v233
    %v235 = vsel %vm85, %v177, 0.0
    %v236 = vrot.slane %v235, 4
    %v237 = vadd.f32 %v235, %v236
    %v238 = vrot.slane %v237, 2
    %v239 = vadd.f32 %v237, %v238
    %v240 = vrot.slane %v239, 1
    %v241 = vadd.f32 %v239, %v240
    %v242 = vld [vmem:[#allocation2] sm:$0xff]
    %v251 = vcombine.low %v92, %v99
    %v252 = vcombine.low %v106, %v113
    %v253 = vcombine.low %v120, %v127
    %v254 = vcombine.low %v134, %v141
    %v256 = vunpack.c.l.s4 1966171168
    %v257 = vunpack.c.0.s8 %v256
    %v258 = vlaneseq
    %v259 = vshrl.u32 %v258, 7
    %v260 = vsub.s32 %v257, %v259
    %v261 = vrot.slane %v251, %v260
    %v263 = vunpack.c.l.s4 1966171168
    %v264 = vunpack.c.0.s8 %v263
    %v265 = vlaneseq
    %v266 = vshrl.u32 %v265, 7
    %v267 = vsub.s32 %v264, %v266
    %v268 = vrot.slane %v252, %v267
    %v270 = vunpack.c.l.s4 1966171168
    %v271 = vunpack.c.0.s8 %v270
    %v272 = vlaneseq
    %v273 = vshrl.u32 %v272, 7
    %v274 = vsub.s32 %v271, %v273
    %v275 = vrot.slane %v253, %v274
    %v277 = vunpack.c.l.s4 1966171168
    %v278 = vunpack.c.0.s8 %v277
    %v279 = vlaneseq
    %v280 = vshrl.u32 %v279, 7
    %v281 = vsub.s32 %v278, %v280
    %v282 = vrot.slane %v254, %v281
    %v283 = vcombine.low %v261, %v268
    %v284 = vcombine.low %v275, %v282
    %v286 = vunpack.c.l.s4 1966171168
    %v287 = vunpack.c.0.s8 %v286
    %v288 = vlaneseq
    %v289 = vshrl.u32 %v288, 7
    %v290 = vsub.s32 %v287, %v289
    %v291 = vrot.slane %v283, %v290
    %v293 = vunpack.c.l.s4 1966171168
    %v294 = vunpack.c.0.s8 %v293
    %v295 = vlaneseq
    %v296 = vshrl.u32 %v295, 7
    %v297 = vsub.s32 %v294, %v296
    %v298 = vrot.slane %v284, %v297
    %v299 = vcombine.low %v291, %v298
    %v301 = vadd.f32 %v242, %v299
    %302 = vst [vmem:[#allocation2] sm:$0xff] %v301
    %v303 = vld [vmem:[#allocation3] sm:$0xff]
    %v312 = vcombine.low %v192, %v199
    %v313 = vcombine.low %v206, %v213
    %v314 = vcombine.low %v220, %v227
    %v315 = vcombine.low %v234, %v241
    %v317 = vunpack.c.l.s4 1966171168
    %v318 = vunpack.c.0.s8 %v317
    %v319 = vlaneseq
    %v320 = vshrl.u32 %v319, 7
    %v321 = vsub.s32 %v318, %v320
    %v322 = vrot.slane %v312, %v321
    %v324 = vunpack.c.l.s4 1966171168
    %v325 = vunpack.c.0.s8 %v324
    %v326 = vlaneseq
    %v327 = vshrl.u32 %v326, 7
    %v328 = vsub.s32 %v325, %v327
    %v329 = vrot.slane %v313, %v328
    %v331 = vunpack.c.l.s4 1966171168
    %v332 = vunpack.c.0.s8 %v331
    %v333 = vlaneseq
    %v334 = vshrl.u32 %v333, 7
    %v335 = vsub.s32 %v332, %v334
    %v336 = vrot.slane %v314, %v335
    %v338 = vunpack.c.l.s4 1966171168
    %v339 = vunpack.c.0.s8 %v338
    %v340 = vlaneseq
    %v341 = vshrl.u32 %v340, 7
    %v342 = vsub.s32 %v339, %v341
    %v343 = vrot.slane %v315, %v342
    %v344 = vcombine.low %v322, %v329
    %v345 = vcombine.low %v336, %v343
    %v347 = vunpack.c.l.s4 1966171168
    %v348 = vunpack.c.0.s8 %v347
    %v349 = vlaneseq
    %v350 = vshrl.u32 %v349, 7
    %v351 = vsub.s32 %v348, %v350
    %v352 = vrot.slane %v344, %v351
    %v354 = vunpack.c.l.s4 1966171168
    %v355 = vunpack.c.0.s8 %v354
    %v356 = vlaneseq
    %v357 = vshrl.u32 %v356, 7
    %v358 = vsub.s32 %v355, %v357
    %v359 = vrot.slane %v345, %v358
    %v360 = vcombine.low %v352, %v359
    %v362 = vadd.f32 %v303, %v360
    %363 = vst [vmem:[#allocation3] sm:$0xff] %v362
    // Predicated region
    $region22: #{my_loss.1} parent=1 // pred_check
      %p364 = pneg %p18
    $region23: #{my_loss.1} parent=1 // pred_check_branch
      %366 = sbr.rel (%p364) target = $region25
    $region24: #{my_loss.1} parent=1 // pred_region
      %v367 = vld [vmem:[#allocation2] sm:$0xff]
      %v369 = vlaneseq
      %v370 = vshrl.u32 %v369, 7
      %v371 = vsub.s32 0, %v370
      %v372 = vrot.slane %v367, %v371
      %v373 = vlaneseq
      %v374 = vshrl.u32 %v373, 7
      %v375 = vsub.s32 1, %v374
      %v376 = vrot.slane %v367, %v375
      %v377 = vlaneseq
      %v378 = vshrl.u32 %v377, 7
      %v379 = vsub.s32 2, %v378
      %v380 = vrot.slane %v367, %v379
      %v381 = vlaneseq
      %v382 = vshrl.u32 %v381, 7
      %v383 = vsub.s32 3, %v382
      %v384 = vrot.slane %v367, %v383
      %v385 = vlaneseq
      %v386 = vshrl.u32 %v385, 7
      %v387 = vsub.s32 4, %v386
      %v388 = vrot.slane %v367, %v387
      %v389 = vlaneseq
      %v390 = vshrl.u32 %v389, 7
      %v391 = vsub.s32 5, %v390
      %v392 = vrot.slane %v367, %v391
      %v393 = vlaneseq
      %v394 = vshrl.u32 %v393, 7
      %v395 = vsub.s32 6, %v394
      %v396 = vrot.slane %v367, %v395
      %v397 = vlaneseq
      %v398 = vshrl.u32 %v397, 7
      %v399 = vsub.s32 7, %v398
      %v400 = vrot.slane %v367, %v399
      %vm409 = vcmask 1040384
      %v410 = vsel %vm409, %v372, 0.0
      %v411 = vsel %vm409, %v376, 0.0
      %v412 = vadd.f32 %v410, %v411
      %v413 = vsel %vm409, %v380, 0.0
      %v414 = vadd.f32 %v412, %v413
      %v415 = vsel %vm409, %v384, 0.0
      %v416 = vadd.f32 %v414, %v415
      %v417 = vsel %vm409, %v388, 0.0
      %v418 = vadd.f32 %v416, %v417
      %v419 = vsel %vm409, %v392, 0.0
      %v420 = vadd.f32 %v418, %v419
      %v421 = vsel %vm409, %v396, 0.0
      %v422 = vadd.f32 %v420, %v421
      %v423 = vsel %vm409, %v400, 0.0
      %v424 = vadd.f32 %v422, %v423
      %425 = vadd.xlane.f32.xlu0 %v424
      %v426 = vpop.xlane.xlu0 %425
      %v427 = vrot.slane %v426, 4
      %v428 = vadd.f32 %v426, %v427
      %v429 = vrot.slane %v428, 2
      %v430 = vadd.f32 %v428, %v429
      %v431 = vrot.slane %v430, 1
      %v432 = vadd.f32 %v430, %v431
      %s433 = vtos %v432
      %v434 = vld [vmem:[#allocation3] sm:$0xff]
      %v436 = vlaneseq
      %v437 = vshrl.u32 %v436, 7
      %v438 = vsub.s32 0, %v437
      %v439 = vrot.slane %v434, %v438
      %v440 = vlaneseq
      %v441 = vshrl.u32 %v440, 7
      %v442 = vsub.s32 1, %v441
      %v443 = vrot.slane %v434, %v442
      %v444 = vlaneseq
      %v445 = vshrl.u32 %v444, 7
      %v446 = vsub.s32 2, %v445
      %v447 = vrot.slane %v434, %v446
      %v448 = vlaneseq
      %v449 = vshrl.u32 %v448, 7
      %v450 = vsub.s32 3, %v449
      %v451 = vrot.slane %v434, %v450
      %v452 = vlaneseq
      %v453 = vshrl.u32 %v452, 7
      %v454 = vsub.s32 4, %v453
      %v455 = vrot.slane %v434, %v454
      %v456 = vlaneseq
      %v457 = vshrl.u32 %v456, 7
      %v458 = vsub.s32 5, %v457
      %v459 = vrot.slane %v434, %v458
      %v460 = vlaneseq
      %v461 = vshrl.u32 %v460, 7
      %v462 = vsub.s32 6, %v461
      %v463 = vrot.slane %v434, %v462
      %v464 = vlaneseq
      %v465 = vshrl.u32 %v464, 7
      %v466 = vsub.s32 7, %v465
      %v467 = vrot.slane %v434, %v466
      %v476 = vsel %vm409, %v439, 0.0
      %v477 = vsel %vm409, %v443, 0.0
      %v478 = vadd.f32 %v476, %v477
      %v479 = vsel %vm409, %v447, 0.0
      %v480 = vadd.f32 %v478, %v479
      %v481 = vsel %vm409, %v451, 0.0
      %v482 = vadd.f32 %v480, %v481
      %v483 = vsel %vm409, %v455, 0.0
      %v484 = vadd.f32 %v482, %v483
      %v485 = vsel %vm409, %v459, 0.0
      %v486 = vadd.f32 %v484, %v485
      %v487 = vsel %vm409, %v463, 0.0
      %v488 = vadd.f32 %v486, %v487
      %v489 = vsel %vm409, %v467, 0.0
      %v490 = vadd.f32 %v488, %v489
      %491 = vadd.xlane.f32.xlu0 %v490
      %v492 = vpop.xlane.xlu0 %491
      %v493 = vrot.slane %v492, 4
      %v494 = vadd.f32 %v492, %v493
      %v495 = vrot.slane %v494, 2
      %v496 = vadd.f32 %v494, %v495
      %v497 = vrot.slane %v496, 1
      %v498 = vadd.f32 %v496, %v497
      %s499 = vtos %v498
      %s500 = ssub.f32 %s499, %s433
      %s501 = sadd.f32 %s500, 1e-06
      %v502 = vstv %s501
      %v503 = vrcp.pop %v502
      %s504 = vtos %v503
      %s505 = smul.f32 %s433, %s504
      %s506 = ssub.f32 1.0, %s505
      %v507 = vld [vmem:[#allocation4] sm:$0x1]
      %v508 = vsel %vm409, %v507, 0.0
      %509 = vadd.xlane.f32.xlu0 %v508
      %v510 = vpop.xlane.xlu0 %509
      %v511 = vrot.slane %v510, 4
      %v512 = vadd.f32 %v510, %v511
      %v513 = vrot.slane %v512, 2
      %v514 = vadd.f32 %v512, %v513
      %v515 = vrot.slane %v514, 1
      %v516 = vadd.f32 %v514, %v515
      %s517 = vtos %v516
      %s518 = smul.f32 %s517, 0.015625
      %v519 = vld [vmem:[#allocation5] sm:$0x1]
      %v520 = vsel %vm409, %v519, 0.0
      %521 = vadd.xlane.f32.xlu0 %v520
      %v522 = vpop.xlane.xlu0 %521
      %v523 = vrot.slane %v522, 4
      %v524 = vadd.f32 %v522, %v523
      %v525 = vrot.slane %v524, 2
      %v526 = vadd.f32 %v524, %v525
      %v527 = vrot.slane %v526, 1
      %v528 = vadd.f32 %v526, %v527
      %s529 = vtos %v528
      %s530 = smul.f32 %s529, 0.015625
      %s531 = sadd.f32 %s530, 1.0
      %s532 = smul.f32 %s506, %s531
      %s533 = sadd.f32 %s532, %s518
      %v534 = vstv %s533
      %535 = vst [vmem:[#allocation6] sm:$0x1] %v534
    $region25: #{my_loss.1} parent=1 // pred_fallthru
      _
    // Predicated region
    $region26: #{my_loss.1} parent=1 // pred_check
      _
    $region27: #{my_loss.1} parent=1 // pred_check_branch
      %537 = sbr.rel (0) target = $region29
    $region28: #{my_loss.1} parent=1 // pred_region
      %s539 = ssub.s32 16, 16
      %540 = vsyncadd [#allocation7], %s539
      %s542 = sshll.u32 [#allocation6], 4
      %s543 = int_to_ptr.vmem [resolvable:$true] %s542
      %545 = dma.vmem_to_hbm [thread:$0]  %s543, 16, %s4, [#allocation7]
    $region29: #{my_loss.1} parent=1 // pred_fallthru
      _
    // Predicated region
    $region30: #{my_loss.1} parent=1 // pred_check
      _
    $region31: #{my_loss.1} parent=1 // pred_check_branch
      %547 = sbr.rel (0) target = $region33
    $region32: #{my_loss.1} parent=1 // pred_region
      %548 = dma.done [#allocation7], 16
    $region33: #{my_loss.1} parent=1 // pred_fallthru
      _
    %549 = vsyncpa [#allocation7], 1

</llo_original>
